<compile_context>
chip_gen: v6e
topology: v6e:2x2x1
jax: 0.10.0
libtpu: 0.0.40
codegen_flags: <defaults>
</compile_context>

<pallas_src>
import functools

import jax
import jax.numpy as jnp
import numpy as np
from jax.experimental import pallas as pl
from jax.experimental.pallas import tpu as pltpu


# --------------------------------------------------------------------------- #
# Tiling / VMEM configuration
# --------------------------------------------------------------------------- #
def _sublane_multiple(dtype):
    """Sublane packing for the dtype: 8 for f32, 16 for bf16, 32 for int8/fp8."""
    return max(8, 32 // max(jnp.dtype(dtype).itemsize, 1))


def _vmem_config():
    """Return (per-block budget bytes, vmem_limit_bytes), generation aware."""
    vmem_cap = None
    try:
        vmem_cap = getattr(pltpu.get_tpu_info(), "vmem_capacity_bytes", None)
    except Exception:
        vmem_cap = None
    if vmem_cap is None:
        vmem_cap = 64 << 20  # conservative: assume the smallest (v7x-sized) VMEM
    if vmem_cap <= (64 << 20):
        # v7x: 64 MiB per TC. ~6 MiB blocks -> ~24-36 MiB resident (double
        # buffered in/out + f32 temps), comfortably under a 46 MiB limit.
        return 6 << 20, 46 << 20
    # v5e / v6e: 128 MiB physical; the scoped default (16/32 MiB) must be
    # raised explicitly for blocks this large.
    return 10 << 20, 64 << 20


def _pick_row_tile(nrows, hw, dtype, budget_bytes):
    """Largest legal row tile R whose (R, HW) block fits the per-block budget.

    Legal = full nrows, or a multiple of the dtype's sublane packing that
    divides nrows. Block cost is counted at f32 width to cover in-kernel f32
    temporaries (important for bf16 inputs).
    """
    row_bytes = hw * max(jnp.dtype(dtype).itemsize, 4)
    if nrows * row_bytes <= budget_bytes:
        return nrows  # whole array in one block (always layout-legal)
    step = _sublane_multiple(dtype)
    candidates = [r for r in range(step, nrows, step) if nrows % r == 0]
    fitting = [r for r in candidates if r * row_bytes <= budget_bytes]
    if fitting:
        return max(fitting)
    if candidates:
        # Even the smallest legal tile exceeds the budget (huge H*W); take it
        # and rely on the generous vmem_limit_bytes.
        # TODO(synk): tile H*W with an accumulating stats pass for extremely
        # large spatial sizes instead of overshooting the per-block budget.
        return min(candidates)
    return nrows  # no sublane-aligned divisor -> full extent (always legal)


# --------------------------------------------------------------------------- #
# Kernels
# --------------------------------------------------------------------------- #
def _stats_kernel(x_ref, mean_ref, std_ref, *, hw, eps):
    """Per-row mean and std of a (R, HW) slab (centered, unbiased variance)."""
    x32 = x_ref[...].astype(jnp.float32)
    mean = jnp.sum(x32, axis=-1, keepdims=True) * (1.0 / hw)          # (R, 1)
    d = x32 - mean
    # torch uses ddof=1; for HW == 1 torch yields NaN, we return 0 instead.
    var = jnp.sum(d * d, axis=-1, keepdims=True) * (1.0 / max(hw - 1, 1))
    mean_ref[...] = mean
    std_ref[...] = jnp.sqrt(var + eps)


def _apply_kernel(x_ref, scale_ref, shift_ref, o_ref):
    """out = x * scale + shift with per-row (R, 1) scale/shift (f32 math)."""
    x32 = x_ref[...].astype(jnp.float32)
    o_ref[...] = (x32 * scale_ref[...] + shift_ref[...]).astype(o_ref.dtype)


# --------------------------------------------------------------------------- #
# Wrapper
# --------------------------------------------------------------------------- #
def adaptive_instance_normalization(x, perm, eps=1e-5):
    """AdaIN where style features are x[perm]. x: (N, C, H, W), perm: (N,) int."""
    N, C, H, W = x.shape
    HW = H * W
    NC = N * C
    itemsize = jnp.dtype(x.dtype).itemsize

    x2 = x.reshape(NC, HW)  # free reshape: NCHW is contiguous over (C, H, W)

    budget_bytes, vmem_limit = _vmem_config()
    R = _pick_row_tile(NC, HW, x.dtype, budget_bytes)
    grid = (NC // R,)
    compiler_params = pltpu.CompilerParams(
        dimension_semantics=("parallel",),   # rows are fully independent
        vmem_limit_bytes=vmem_limit,
    )

    # ---- Pass 1: per-(n, c) mean / std -------------------------------------
    mean, std = pl.pallas_call(
        functools.partial(_stats_kernel, hw=HW, eps=eps),
        out_shape=(jax.ShapeDtypeStruct((NC, 1), jnp.float32),
                   jax.ShapeDtypeStruct((NC, 1), jnp.float32)),
        grid_spec=pl.GridSpec(
            grid=grid,
            in_specs=[pl.BlockSpec((R, HW), lambda i: (i, 0))],
            out_specs=[pl.BlockSpec((R, 1), lambda i: (i, 0)),
                       pl.BlockSpec((R, 1), lambda i: (i, 0))],
        ),
        compiler_params=compiler_params,
        cost_estimate=pl.CostEstimate(
            flops=4 * NC * HW,
            transcendentals=NC,
            bytes_accessed=NC * HW * itemsize + 2 * NC * 4),
    )(x2)

    # ---- Tiny (N, C) stat algebra + permutation gather in plain JAX ---------
    mean_nc = mean.reshape(N, C)
    std_nc = std.reshape(N, C)
    c_mean = mean_nc
    c_std = std_nc + eps                   # content_std = content_std + eps
    s_mean = mean_nc[perm]                 # style stats = stats of x[perm]
    s_std = std_nc[perm]
    scale_nc = s_std / c_std
    shift_nc = s_mean - c_mean * scale_nc
    scale = scale_nc.reshape(NC, 1).astype(jnp.float32)
    shift = shift_nc.reshape(NC, 1).astype(jnp.float32)

    # ---- Pass 2: fused per-row affine ---------------------------------------
    # TODO(synk): if traces still show exposed DMA at very small H*W, add
    # pipeline_mode=pl.Buffered(3) to the x input spec (budget permitting).
    out2 = pl.pallas_call(
        _apply_kernel,
        out_shape=jax.ShapeDtypeStruct((NC, HW), x.dtype),
        grid_spec=pl.GridSpec(
            grid=grid,
            in_specs=[pl.BlockSpec((R, HW), lambda i: (i, 0)),
                      pl.BlockSpec((R, 1), lambda i: (i, 0)),
                      pl.BlockSpec((R, 1), lambda i: (i, 0))],
            out_specs=pl.BlockSpec((R, HW), lambda i: (i, 0)),
        ),
        compiler_params=compiler_params,
        cost_estimate=pl.CostEstimate(
            flops=2 * NC * HW,
            transcendentals=0,
            bytes_accessed=2 * NC * HW * itemsize + 2 * NC * 4),
    )(x2, scale, shift)

    return out2.reshape(N, C, H, W)


class PermuteAdaptiveInstanceNorm2d:
    """JAX/Pallas port of the PyTorch pAdaIN module. No learned parameters."""

    def __init__(self, prob=0.01, eps=1e-5):
        self.p = prob
        self.eps = eps
        self.training = True

    def __call__(self, x, key):
        # Host-side stochastic gate, mirroring `np.random.random() > self.p`.
        # TODO(synk): this gate is host-side (not jittable); under jit tracing
        # it is resolved once at trace time, matching the original's eager
        # behavior only outside jit.
        if (np.random.random() > self.p) or (not self.training):
            return x
        perm = jax.random.permutation(key, x.shape[0]).astype(jnp.int32)
        return adaptive_instance_normalization(x, perm, self.eps)

    def __repr__(self):
        return f"pAdaIN(p={self.p}, eps={self.eps})"


# --------------------------------------------------------------------------- #
# Pure-JAX reference + self-test
# --------------------------------------------------------------------------- #
def _reference_adain(x, perm, eps=1e-5):
    """Pure-JAX reference mirroring the PyTorch code (unbiased variance)."""
    N, C, H, W = x.shape
    xf = x.reshape(N, C, -1).astype(jnp.float32)
    c_mean = xf.mean(axis=2)[:, :, None, None]
    c_var = xf.var(axis=2, ddof=1)[:, :, None, None]
    c_std = jnp.sqrt(c_var + eps) + eps
    sf = xf[perm]
    s_mean = sf.mean(axis=2)[:, :, None, None]
    s_var = sf.var(axis=2, ddof=1)[:, :, None, None]
    s_std = jnp.sqrt(s_var + eps)
    out = (x.astype(jnp.float32) - c_mean) / c_std * s_std + s_mean
    return out.astype(x.dtype)


if __name__ == "__main__":
    key = jax.random.PRNGKey(0)
    kx, kp, kx2, kp2 = jax.random.split(key, 4)

    # Primary small shape consistent with the module.
    N, C, H, W = 2, 4, 16, 16
    x = jax.random.normal(kx, (N, C, H, W), dtype=jnp.float32)
    perm = jax.random.permutation(kp, N).astype(jnp.int32)

    out = jax.block_until_ready(adaptive_instance_normalization(x, perm, eps=1e-5))
    ref = _reference_adain(x, perm, eps=1e-5)
    np.testing.assert_allclose(np.asarray(out), np.asarray(ref), rtol=1e-4, atol=1e-5)

    # Second shape: odd spatial size (H*W not a multiple of 128), more channels.
    N2, C2, H2, W2 = 3, 8, 24, 20
    x2 = jax.random.normal(kx2, (N2, C2, H2, W2), dtype=jnp.float32)
    perm2 = jax.random.permutation(kp2, N2).astype(jnp.int32)
    out2 = jax.block_until_ready(adaptive_instance_normalization(x2, perm2, eps=1e-5))
    ref2 = _reference_adain(x2, perm2, eps=1e-5)
    np.testing.assert_allclose(np.asarray(out2), np.asarray(ref2), rtol=1e-4, atol=1e-5)

    # Exercise the module wrapper (identity path when the random gate doesn't fire).
    np.random.seed(0)
    mod = PermuteAdaptiveInstanceNorm2d(prob=0.01, eps=1e-5)
    _ = jax.block_until_ready(mod(x, kp))

    print("KERNEL_OK")
</pallas_src>

<mosaic_0001>
module attributes {stable_mosaic.version = 11 : i64} {
  func.func @_stats_kernel(%arg0: i32, %arg1: memref<8x256xf32, #tpu.memory_space<vmem>>, %arg2: memref<8x1xf32, #tpu.memory_space<vmem>>, %arg3: memref<8x1xf32, #tpu.memory_space<vmem>>) attributes {dimension_semantics = [#tpu.dimension_semantics<parallel>], iteration_bounds = array<i64: 1>, scalar_prefetch = 0 : i64, scratch_operands = 0 : i64, tpu.core_type = #tpu.core_type<tc>, window_params = [{transform_indices = @transform_0, window_bounds = array<i64: 8, 256>}, {transform_indices = @transform_1, window_bounds = array<i64: 8, 1>}, {transform_indices = @transform_2, window_bounds = array<i64: 8, 1>}]} {
    %c0 = arith.constant 0 : index
    %c0_0 = arith.constant 0 : index
    %0 = vector.load %arg1[%c0, %c0_0] : memref<8x256xf32, #tpu.memory_space<vmem>>, vector<8x256xf32>
    %cst = arith.constant dense<0.000000e+00> : vector<8xf32>
    %1 = vector.multi_reduction <add>, %0, %cst [1] : vector<8x256xf32> to vector<8xf32>
    %2 = vector.shape_cast %1 : vector<8xf32> to vector<8x1xf32>
    %cst_1 = arith.constant 3.906250e-03 : f32
    %3 = vector.broadcast %cst_1 : f32 to vector<8x1xf32>
    %4 = arith.mulf %2, %3 : vector<8x1xf32>
    %5 = vector.broadcast %4 : vector<8x1xf32> to vector<8x256xf32>
    %6 = arith.subf %0, %5 : vector<8x256xf32>
    %7 = arith.mulf %6, %6 : vector<8x256xf32>
    %cst_2 = arith.constant dense<0.000000e+00> : vector<8xf32>
    %8 = vector.multi_reduction <add>, %7, %cst_2 [1] : vector<8x256xf32> to vector<8xf32>
    %9 = vector.shape_cast %8 : vector<8xf32> to vector<8x1xf32>
    %cst_3 = arith.constant 0.00392156886 : f32
    %10 = vector.broadcast %cst_3 : f32 to vector<8x1xf32>
    %11 = arith.mulf %9, %10 : vector<8x1xf32>
    %c0_4 = arith.constant 0 : index
    %c0_5 = arith.constant 0 : index
    %12 = vector.load %arg2[%c0_4, %c0_5] : memref<8x1xf32, #tpu.memory_space<vmem>>, vector<8x1xf32>
    tpu.vector_store %arg2[%c0_4, %c0_5], %4 {strides = array<i32>} : memref<8x1xf32, #tpu.memory_space<vmem>>, vector<8x1xf32>,
    %cst_6 = arith.constant 9.99999974E-6 : f32
    %13 = vector.broadcast %cst_6 : f32 to vector<8x1xf32>
    %14 = arith.addf %11, %13 : vector<8x1xf32>
    %15 = math.sqrt %14 : vector<8x1xf32>
    %c0_7 = arith.constant 0 : index
    %c0_8 = arith.constant 0 : index
    %16 = vector.load %arg3[%c0_7, %c0_8] : memref<8x1xf32, #tpu.memory_space<vmem>>, vector<8x1xf32>
    tpu.vector_store %arg3[%c0_7, %c0_8], %15 {strides = array<i32>} : memref<8x1xf32, #tpu.memory_space<vmem>>, vector<8x1xf32>,
    return
  }
  func.func @transform_0(%arg0: i32) -> (i32, i32) {
    %c0_i32 = arith.constant 0 : i32
    %c0_i32_0 = arith.constant 0 : i32
    return %arg0, %c0_i32 : i32, i32
  }
  func.func @transform_1(%arg0: i32) -> (i32, i32) {
    %c0_i32 = arith.constant 0 : i32
    %c0_i32_0 = arith.constant 0 : i32
    return %arg0, %c0_i32 : i32, i32
  }
  func.func @transform_2(%arg0: i32) -> (i32, i32) {
    %c0_i32 = arith.constant 0 : i32
    %c0_i32_0 = arith.constant 0 : i32
    return %arg0, %c0_i32 : i32, i32
  }
}

</mosaic_0001>

<llo_original>
// kernel: tpu_custom_call.1
$region0: #{tpu_custom_call.1}
  #allocation0 [shape = 'u32[]', space=smem, size = 0x4, offset = 0x4, fixed_abs, tag = 'smem constant byte address 0x4 - core index']
  #allocation1 [shape = 'u32[144,128]{1,0:T(1,128)}', space=vmem, size = 0x12000, scoped, tag = 'internal scratch']
  %s0 = inlined_call_operand.hbm [shape: f32[8,256], index: 0, kind: input, shape index: {}]
  %s1 = inlined_call_operand.vmem [shape: f32[8,1], index: 1, kind: output, shape index: {0}]
  %s2 = inlined_call_operand.vmem [shape: f32[8,1], index: 2, kind: output, shape index: {1}]
  %3 = xla_tuple %s1, %s2
  %s4 = sld [smem:[#allocation0]]
  $region26: #{tpu_custom_call.1} parent=0
    _
  %s6 = ssub.s32 1, %s4
  %s7 = scalar_select 0, %s6, %s4
  $region1: #{tpu_custom_call.1} parent=0
    #allocation2 [shape = 'u8[8192]{0}', space=vmem, size = 0x2000, scoped, tag = 'input window, operand 0, single buffered']
    #allocation3 [shape = 's32[1]{0}', space=sflag, size = 0x4, scoped, tag = 'scoped memory for tpu_custom_call.1']
    %8 = vsyncpa [#allocation3], 0
    // Predicated region
    $region2: #{tpu_custom_call.1} parent=1 // pred_check
      _
    $region3: #{tpu_custom_call.1} parent=1 // pred_check_branch
      %10 = sbr.rel (0) target = $region5
    $region4: #{tpu_custom_call.1} parent=1 // pred_region
      %s12 = ssub.s32 256, 256
      %13 = vsyncadd [#allocation3], %s12
      %s15 = sshll.u32 [#allocation2], 4
      %s16 = int_to_ptr.vmem [resolvable:$true] %s15
      %18 = dma.hbm_to_vmem [thread:$0]  %s0, 256, %s16, [#allocation3]
    $region5: #{tpu_custom_call.1} parent=1 // pred_fallthru
      _
    // Predicated region
    $region6: #{tpu_custom_call.1} parent=1 // pred_check
      _
    $region7: #{tpu_custom_call.1} parent=1 // pred_check_branch
      %20 = sbr.rel (0) target = $region9
    $region8: #{tpu_custom_call.1} parent=1 // pred_region
      %21 = dma.done [#allocation3], 256
    $region9: #{tpu_custom_call.1} parent=1 // pred_fallthru
      _
    %v22 = vld [vmem:[#allocation2] sm:$0xff]
    %v23 = vld [vmem:[#allocation2 + $0x8] sm:$0xff]
    %v24 = vadd.f32 %v22, %v23
    %25 = vadd.xlane.f32.xlu0 %v24
    %v26 = vpop.xlane.xlu0 %25
    %v27 = vmul.f32 %v26, 0.00390625
    %v28 = vsub.f32 %v22, %v27
    %v29 = vsub.f32 %v23, %v27
    %v30 = vmul.f32 %v28, %v28
    %v31 = vmul.f32 %v29, %v29
    %v32 = vadd.f32 %v30, %v31
    %33 = vadd.xlane.f32.xlu0 %v32
    %v34 = vpop.xlane.xlu0 %33
    %v35 = vmul.f32 %v34, 0.003921569
    %vm36 = vcmask 7168
    %37 = vst.msk [vmem:[%s1] sm:$0xff] %vm36, %v27
    %v38 = vadd.f32 %v35, 1e-05
    %v39 = vrsqrt.pop %v38
    %v40 = vmul.f32 %v38, %v39
    %vm41 = vcmp.eq.f32.partialorder %v38, inf
    %v42 = vsel %vm41, %v38, %v40
    %vm43 = vcmp.eq.f32.partialorder %v38, 0.0
    %v44 = vand.u32 %v38, 2147483648
    %v45 = vsel %vm43, %v44, %v42
    %46 = vst.msk [vmem:[%s2] sm:$0xff] %vm36, %v45
    // Predicated region
    $region10: #{tpu_custom_call.1} parent=1 // pred_check
      _
    $region11: #{tpu_custom_call.1} parent=1 // pred_check_branch
      %48 = sbr.rel (0) target = $region13
    $region12: #{tpu_custom_call.1} parent=1 // pred_region
      _
    $region13: #{tpu_custom_call.1} parent=1 // pred_fallthru
      _
    // Predicated region
    $region14: #{tpu_custom_call.1} parent=1 // pred_check
      _
    $region15: #{tpu_custom_call.1} parent=1 // pred_check_branch
      %50 = sbr.rel (0) target = $region17
    $region16: #{tpu_custom_call.1} parent=1 // pred_region
      _
    $region17: #{tpu_custom_call.1} parent=1 // pred_fallthru
      _
    // Predicated region
    $region18: #{tpu_custom_call.1} parent=1 // pred_check
      _
    $region19: #{tpu_custom_call.1} parent=1 // pred_check_branch
      %52 = sbr.rel (0) target = $region21
    $region20: #{tpu_custom_call.1} parent=1 // pred_region
      _
    $region21: #{tpu_custom_call.1} parent=1 // pred_fallthru
      _
    // Predicated region
    $region22: #{tpu_custom_call.1} parent=1 // pred_check
      _
    $region23: #{tpu_custom_call.1} parent=1 // pred_check_branch
      %54 = sbr.rel (0) target = $region25
    $region24: #{tpu_custom_call.1} parent=1 // pred_region
      _
    $region25: #{tpu_custom_call.1} parent=1 // pred_fallthru
      _
    %55 = vsyncpa [#allocation3], 1

</llo_original>
